<compile_context>
chip_gen: v7x
topology: tpu7x:2x2x1
jax: 0.10.0
libtpu: 0.0.40
codegen_flags: <defaults>
</compile_context>

<pallas_src>
import functools

import jax
import jax.numpy as jnp
from jax import lax
from jax.experimental import pallas as pl
from jax.experimental.pallas import tpu as pltpu


def _round_up(x, m):
    return (x + m - 1) // m * m


# ---------------------------------------------------------------------------
# Pallas kernel: one (TM, Kpad) x (Kpad, Npad) matmul + bias + ReLU per step.
# ---------------------------------------------------------------------------
def _repvgg_down_kernel(lhs_ref, w_ref, b_ref, o_ref):
    # lhs_ref: (1, TM, Kpad)   im2col rows (compute dtype, lane-dense K)
    # w_ref  : (Kpad, Npad)    fused (BN-folded, 1x1-merged) weights
    # b_ref  : (1, Npad)       fused bias (f32)
    # o_ref  : (1, TM, Npad)   output rows (f32, lane-dense)
    acc = jnp.dot(lhs_ref[0], w_ref[...], preferred_element_type=jnp.float32)
    out = jnp.maximum(acc + b_ref[...], 0.0)          # bias + ReLU in f32 (VPU)
    o_ref[...] = out.reshape(o_ref.shape).astype(o_ref.dtype)


# ---------------------------------------------------------------------------
# Glue: BN folding, 1x1 merge, im2col, padding to lane-dense shapes.
# ---------------------------------------------------------------------------
def _fold_branches(params, eps=1e-5):
    """Fold eval-mode BN into both convs and merge the 1x1 branch into the
    3x3 center tap.  Valid exactly for the RepVGGBlockDown config
    (3x3 stride=2 pad=1  +  1x1 stride=2 pad=0): the 1x1 tap coincides with
    the 3x3 center tap for every output pixel."""
    w3, w1 = params["w3"], params["w1"]          # (Cout,Cin,3,3), (Cout,Cin,1,1)
    g3, b3, m3, v3 = params["bn3"]
    g1, b1, m1, v1 = params["bn1"]
    t3 = g3 / jnp.sqrt(v3 + eps)
    t1 = g1 / jnp.sqrt(v1 + eps)
    fw3 = w3 * t3[:, None, None, None]
    fb3 = b3 - m3 * t3
    fw1 = w1 * t1[:, None, None, None]
    fb1 = b1 - m1 * t1
    w_eq = fw3.at[:, :, 1, 1].add(fw1[:, :, 0, 0])   # (Cout,Cin,3,3)
    b_eq = fb3 + fb1                                 # (Cout,)
    return w_eq, b_eq


def repvgg_block_down(x_nchw, params, *, compute_dtype=jnp.bfloat16,
                      row_block=512, eps=1e-5):
    """RepVGGBlockDown forward (eval-mode BN). x_nchw: (N,Cin,H,W) f32 ->
    (N,Cout,Ho,Wo) f32."""
    N, Cin, H, W = x_nchw.shape
    Cout = params["w3"].shape[0]
    Ho = (H - 1) // 2 + 1          # 3x3 s2 p1 output size (== 1x1 s2 p0)
    Wo = (W - 1) // 2 + 1

    # ---- fold BN + merge 1x1, reshape to GEMM weights ---------------------
    w_eq, b_eq = _fold_branches(params, eps)
    # (kh, kw, cin) -> contraction rows; must match im2col concat order below.
    w_mat = jnp.transpose(w_eq, (2, 3, 1, 0)).reshape(9 * Cin, Cout)

    K = 9 * Cin
    Kpad = _round_up(K, 128)                 # lane-dense contraction dim
    Npad = _round_up(Cout, 128)              # lane-dense output dim
    M = Ho * Wo
    TM = min(row_block, _round_up(M, 8))     # spatial tile (sublane multiple)
    Mpad = _round_up(M, TM)

    w_pad = jnp.zeros((Kpad, Npad), compute_dtype)
    w_pad = w_pad.at[:K, :Cout].set(w_mat.astype(compute_dtype))
    b_pad = jnp.zeros((1, Npad), jnp.float32).at[:, :Cout].set(b_eq)

    # ---- im2col in glue (stride 2, pad 1): 9 shifted strided slices -------
    # TODO(synk): in a full NHWC-native pipeline the NCHW<->NHWC transposes
    # below disappear; they only exist to match the PyTorch I/O layout.
    x = jnp.transpose(x_nchw, (0, 2, 3, 1))                    # (N,H,W,Cin)
    xp = jnp.pad(x, ((0, 0), (1, 1), (1, 1), (0, 0)))
    taps = [xp[:, kh::2, kw::2, :][:, :Ho, :Wo, :]
            for kh in range(3) for kw in range(3)]
    lhs = jnp.concatenate(taps, axis=-1).reshape(N, M, K)      # (N, Ho*Wo, 9*Cin)
    lhs = jnp.pad(lhs, ((0, 0), (0, Mpad - M), (0, Kpad - K)))
    lhs = lhs.astype(compute_dtype)

    cost = pl.CostEstimate(
        flops=int(2 * N * Mpad * Kpad * Npad),
        transcendentals=0,
        bytes_accessed=int(lhs.size * lhs.dtype.itemsize
                           + w_pad.size * w_pad.dtype.itemsize
                           + b_pad.size * 4
                           + N * Mpad * Npad * 4))

    out_pad = pl.pallas_call(
        _repvgg_down_kernel,
        out_shape=jax.ShapeDtypeStruct((N, Mpad, Npad), jnp.float32),
        grid_spec=pltpu.PrefetchScalarGridSpec(
            num_scalar_prefetch=0,
            grid=(N, Mpad // TM),
            in_specs=[
                pl.BlockSpec((1, TM, Kpad), lambda n, m: (n, m, 0)),
                pl.BlockSpec((Kpad, Npad), lambda n, m: (0, 0)),
                pl.BlockSpec((1, Npad), lambda n, m: (0, 0)),
            ],
            out_specs=pl.BlockSpec((1, TM, Npad), lambda n, m: (n, m, 0)),
        ),
        compiler_params=pltpu.CompilerParams(
            dimension_semantics=("parallel", "parallel"),
            vmem_limit_bytes=32 * 1024 * 1024),
        cost_estimate=cost,
    )(lhs, w_pad, b_pad)

    out = out_pad[:, :M, :Cout].reshape(N, Ho, Wo, Cout)
    return jnp.transpose(out, (0, 3, 1, 2))                    # back to NCHW


# ---------------------------------------------------------------------------
# Pure-JAX reference: relu(BN3(conv3(x)) + BN1(conv1(x))), eval-mode BN.
# ---------------------------------------------------------------------------
def _reference(x_nchw, params, eps=1e-5):
    w3, w1 = params["w3"], params["w1"]
    g3, b3, m3, v3 = params["bn3"]
    g1, b1, m1, v1 = params["bn1"]
    dn = lax.conv_dimension_numbers(x_nchw.shape, w3.shape, ("NCHW", "OIHW", "NCHW"))
    y3 = lax.conv_general_dilated(x_nchw, w3, (2, 2), ((1, 1), (1, 1)),
                                  dimension_numbers=dn)
    y1 = lax.conv_general_dilated(x_nchw, w1, (2, 2), ((0, 0), (0, 0)),
                                  dimension_numbers=dn)
    bn = lambda y, g, b, m, v: (y - m[None, :, None, None]) / jnp.sqrt(
        v[None, :, None, None] + eps) * g[None, :, None, None] + b[None, :, None, None]
    return jnp.maximum(bn(y3, g3, b3, m3, v3) + bn(y1, g1, b1, m1, v1), 0.0)


if __name__ == "__main__":
    key = jax.random.PRNGKey(0)

    def make_params(k, cin, cout):
        ks = jax.random.split(k, 10)
        return {
            "w3": jax.random.normal(ks[0], (cout, cin, 3, 3), jnp.float32) * 0.1,
            "w1": jax.random.normal(ks[1], (cout, cin, 1, 1), jnp.float32) * 0.1,
            "bn3": (jax.random.normal(ks[2], (cout,), jnp.float32) * 0.1 + 1.0,   # gamma
                    jax.random.normal(ks[3], (cout,), jnp.float32) * 0.1,         # beta
                    jax.random.normal(ks[4], (cout,), jnp.float32) * 0.1,         # mean
                    jax.random.uniform(ks[5], (cout,), jnp.float32,
                                       minval=0.5, maxval=1.5)),                  # var
            "bn1": (jax.random.normal(ks[6], (cout,), jnp.float32) * 0.1 + 1.0,
                    jax.random.normal(ks[7], (cout,), jnp.float32) * 0.1,
                    jax.random.normal(ks[8], (cout,), jnp.float32) * 0.1,
                    jax.random.uniform(ks[9], (cout,), jnp.float32,
                                       minval=0.5, maxval=1.5)),
        }

    k1, k2, k3, k4 = jax.random.split(key, 4)

    # --- test 1: default bf16 matmul operands (f32 accumulate), even spatial ---
    N, Cin, Cout, H, W = 2, 4, 8, 16, 16
    x = jax.random.normal(k1, (N, Cin, H, W), jnp.float32)
    params = make_params(k2, Cin, Cout)

    fn_bf16 = jax.jit(functools.partial(repvgg_block_down, compute_dtype=jnp.bfloat16))
    out = jax.block_until_ready(fn_bf16(x, params))
    ref = jax.block_until_ready(_reference(x, params))
    assert out.shape == (N, Cout, H // 2, W // 2), out.shape
    assert jnp.allclose(out, ref, atol=3e-2, rtol=3e-2), float(jnp.abs(out - ref).max())

    # --- test 2: f32 operands, tight tolerance ---------------------------------
    fn_f32 = jax.jit(functools.partial(repvgg_block_down, compute_dtype=jnp.float32))
    out32 = jax.block_until_ready(fn_f32(x, params))
    assert jnp.allclose(out32, ref, atol=1e-4, rtol=1e-4), float(jnp.abs(out32 - ref).max())

    # --- test 3: odd spatial size (general Ho/Wo handling), f32 ----------------
    N2, Cin2, Cout2, H2, W2 = 1, 3, 16, 15, 15
    x2 = jax.random.normal(k3, (N2, Cin2, H2, W2), jnp.float32)
    params2 = make_params(k4, Cin2, Cout2)
    out2 = jax.block_until_ready(fn_f32(x2, params2))
    ref2 = jax.block_until_ready(_reference(x2, params2))
    assert out2.shape == ref2.shape == (N2, Cout2, 8, 8), out2.shape
    assert jnp.allclose(out2, ref2, atol=1e-4, rtol=1e-4), float(jnp.abs(out2 - ref2).max())

    print("KERNEL_OK")
</pallas_src>

<mosaic_0001>
module attributes {stable_mosaic.version = 11 : i64} {
  func.func @_repvgg_down_kernel(%arg0: i32, %arg1: i32, %arg2: memref<1x64x128xbf16, #tpu.memory_space<vmem>>, %arg3: memref<128x128xbf16, #tpu.memory_space<vmem>>, %arg4: memref<1x128xf32, #tpu.memory_space<vmem>>, %arg5: memref<1x64x128xf32, #tpu.memory_space<vmem>>) attributes {dimension_semantics = [#tpu.dimension_semantics<parallel>, #tpu.dimension_semantics<parallel>], iteration_bounds = array<i64: 2, 1>, scalar_prefetch = 0 : i64, scratch_operands = 0 : i64, tpu.core_type = #tpu.core_type<tc>, window_params = [{transform_indices = @transform_0, window_bounds = array<i64: 1, 64, 128>}, {pipeline_mode = #tpu.pipeline_mode<synchronous>, transform_indices = @transform_1, window_bounds = array<i64: 128, 128>}, {pipeline_mode = #tpu.pipeline_mode<synchronous>, transform_indices = @transform_2, window_bounds = array<i64: 1, 128>}, {transform_indices = @transform_3, window_bounds = array<i64: 1, 64, 128>}]} {
    %c0 = arith.constant 0 : index
    %c0_0 = arith.constant 0 : index
    %c0_1 = arith.constant 0 : index
    %0 = vector.load %arg2[%c0, %c0_0, %c0_1] : memref<1x64x128xbf16, #tpu.memory_space<vmem>>, vector<1x64x128xbf16>
    %1 = vector.shape_cast %0 : vector<1x64x128xbf16> to vector<64x128xbf16>
    %c0_2 = arith.constant 0 : index
    %c0_3 = arith.constant 0 : index
    %2 = vector.load %arg3[%c0_2, %c0_3] : memref<128x128xbf16, #tpu.memory_space<vmem>>, vector<128x128xbf16>
    %cst = arith.constant dense<0.000000e+00> : vector<64x128xf32>
    %3 = tpu.matmul %1, %2, %cst {dimension_numbers = #tpu.dot_dimension_numbers<[1], [0], [0], [1], [0, 0, 1, 1], [], []>} : vector<64x128xbf16>, vector<128x128xbf16>, vector<64x128xf32> -> vector<64x128xf32>
    %c0_4 = arith.constant 0 : index
    %c0_5 = arith.constant 0 : index
    %4 = vector.load %arg4[%c0_4, %c0_5] : memref<1x128xf32, #tpu.memory_space<vmem>>, vector<1x128xf32>
    %5 = vector.broadcast %4 : vector<1x128xf32> to vector<64x128xf32>
    %6 = arith.addf %3, %5 : vector<64x128xf32>
    %cst_6 = arith.constant 0.000000e+00 : f32
    %7 = vector.broadcast %cst_6 : f32 to vector<64x128xf32>
    %8 = arith.maximumf %6, %7 : vector<64x128xf32>
    %9 = vector.shape_cast %8 : vector<64x128xf32> to vector<1x64x128xf32>
    %c0_7 = arith.constant 0 : index
    %c0_8 = arith.constant 0 : index
    %c0_9 = arith.constant 0 : index
    %10 = vector.load %arg5[%c0_7, %c0_8, %c0_9] : memref<1x64x128xf32, #tpu.memory_space<vmem>>, vector<1x64x128xf32>
    tpu.vector_store %arg5[%c0_7, %c0_8, %c0_9], %9 {strides = array<i32>} : memref<1x64x128xf32, #tpu.memory_space<vmem>>, vector<1x64x128xf32>,
    return
  }
  func.func @transform_0(%arg0: i32, %arg1: i32) -> (i32, i32, i32) {
    %c0_i32 = arith.constant 0 : i32
    %c0_i32_0 = arith.constant 0 : i32
    return %arg0, %arg1, %c0_i32 : i32, i32, i32
  }
  func.func @transform_1(%arg0: i32, %arg1: i32) -> (i32, i32) {
    %c0_i32 = arith.constant 0 : i32
    %c0_i32_0 = arith.constant 0 : i32
    %c0_i32_1 = arith.constant 0 : i32
    return %c0_i32, %c0_i32_0 : i32, i32
  }
  func.func @transform_2(%arg0: i32, %arg1: i32) -> (i32, i32) {
    %c0_i32 = arith.constant 0 : i32
    %c0_i32_0 = arith.constant 0 : i32
    %c0_i32_1 = arith.constant 0 : i32
    return %c0_i32, %c0_i32_0 : i32, i32
  }
  func.func @transform_3(%arg0: i32, %arg1: i32) -> (i32, i32, i32) {
    %c0_i32 = arith.constant 0 : i32
    %c0_i32_0 = arith.constant 0 : i32
    return %arg0, %arg1, %c0_i32 : i32, i32, i32
  }
}

</mosaic_0001>

<llo_original>
// kernel: repvgg_block_down.1
$region0: #{repvgg_block_down.1}
  #allocation0 [shape = 'u32[]', space=smem, size = 0x4, offset = 0x4, fixed_abs, tag = 'smem constant byte address 0x4 - core index']
  #allocation1 [shape = 'u32[144,128]{1,0:T(1,128)}', space=vmem, size = 0x12000, scoped, tag = 'internal scratch']
  %s0 = inlined_call_operand.vmem [shape: bf16[2,64,128], index: 0, kind: input, shape index: {}]
  %s1 = inlined_call_operand.vmem [shape: bf16[128,128], index: 1, kind: input, shape index: {}]
  %s2 = inlined_call_operand.vmem [shape: f32[1,128], index: 2, kind: input, shape index: {}]
  %s3 = inlined_call_operand.vmem [shape: f32[2,64,128], index: 3, kind: output, shape index: {}]
  %s4 = sld [smem:[#allocation0]]
  $region45: #{repvgg_block_down.1} parent=0
    _
  %s6 = ssub.s32 1, %s4
  %s7 = scalar_select 0, %s6, %s4
  loop: start=0, step=1, limit=4
  $region2: #{repvgg_block_down.1} parent=0 // loop_pre_header
    _
  $region3: #{repvgg_block_down.1} parent=0 // loop_header
    %s9 = sphi 0, %s13
    %p10 = scmp.ge.s32.totalorder %s9, 4
    %s16 = sphi 0, %s28
    %s17 = sphi 0, %s24
    %s18 = sphi 0, %s16
    %s19 = sphi 0, %s17
    %s20 = sphi 0, %s18
    %s21 = sphi 0, %s19
    %s33 = sphi 0, %s35
    %s36 = sphi 0, %s33
    %s37 = sphi 0, %s36
    %s53 = sphi 0, %s37
    %s57 = sphi 0, %s57
    %s59 = sphi 0, %s57
    %s60 = sphi 0, %s59
    %s74 = sphi 0, %s60
    %s78 = sphi 0, %s78
    %s80 = sphi 0, %s78
    %s81 = sphi 0, %s80
    %s95 = sphi 0, %s81
    %s103 = sphi 0, %s105
    %s106 = sphi 0, %s103
    %s107 = sphi 0, %s106
    %s123 = sphi 0, %s107
  $region4: #{repvgg_block_down.1} parent=0 // loop_header_branch
    %12 = sbr.rel (%p10) target = $region8
  $region5: #{repvgg_block_down.1} parent=0 // loop_body
    %s14 = ssub.s32 %s9, 1
    %s15 = ssub.s32 %s9, 2
    %s22 = sadd.s32 1, %s17
    %p23 = scmp.ge.s32.totalorder %s22, 1
    %s24 = scalar_select %p23, 0, %s22
    %s25 = sadd.s32 1, %s16
    %s26 = scalar_select %p23, %s25, %s16
    %p27 = scmp.ge.s32.totalorder %s26, 2
    %s28 = scalar_select %p27, 0, %s26
    %s29 = ssub.s32 %s16, %s28
    %s30 = ssub.s32 %s17, %s24
    %s31 = sor.u32 %s29, %s30
    %p32 = scmp.eq.s32.totalorder %s31, 0
    %s34 = sadd.s32 %s33, 1
    %s35 = scalar_select %p32, %s33, %s34
    %p38 = pneg %p32
    %p39 = scmp.eq.s32.totalorder %s9, 1
    %p40 = por %p38, %p39
    %p41 = scmp.ne.s32.totalorder %s33, %s36
    %p42 = scmp.eq.s32.totalorder %s9, 0
    %p43 = por %p41, %p42
    %p44 = scmp.ne.s32.totalorder %s33, %s36
    %p45 = scmp.eq.s32.totalorder %s14, 1
    %p46 = por %p44, %p45
    %p47 = scmp.ne.s32.totalorder %s36, %s37
    %p48 = scmp.eq.s32.totalorder %s14, 0
    %p49 = por %p47, %p48
    %p50 = scmp.ne.s32.totalorder %s36, %s37
    %p51 = scmp.eq.s32.totalorder %s15, 1
    %p52 = por %p50, %p51
    %p54 = scmp.ne.s32.totalorder %s37, %s53
    %p55 = scmp.eq.s32.totalorder %s15, 0
    %p56 = por %p54, %p55
    %s58 = sadd.s32 %s57, 1
    %p61 = scmp.eq.s32.totalorder %s9, 1
    %p62 = scmp.ne.s32.totalorder %s57, %s59
    %p63 = scmp.eq.s32.totalorder %s9, 0
    %p64 = por %p62, %p63
    %p65 = scmp.ne.s32.totalorder %s57, %s59
    %p66 = scmp.eq.s32.totalorder %s14, 1
    %p67 = por %p65, %p66
    %p68 = scmp.ne.s32.totalorder %s59, %s60
    %p69 = scmp.eq.s32.totalorder %s14, 0
    %p70 = por %p68, %p69
    %p71 = scmp.ne.s32.totalorder %s59, %s60
    %p72 = scmp.eq.s32.totalorder %s15, 1
    %p73 = por %p71, %p72
    %p75 = scmp.ne.s32.totalorder %s60, %s74
    %p76 = scmp.eq.s32.totalorder %s15, 0
    %p77 = por %p75, %p76
    %s79 = sadd.s32 %s78, 1
    %p82 = scmp.eq.s32.totalorder %s9, 1
    %p83 = scmp.ne.s32.totalorder %s78, %s80
    %p84 = scmp.eq.s32.totalorder %s9, 0
    %p85 = por %p83, %p84
    %p86 = scmp.ne.s32.totalorder %s78, %s80
    %p87 = scmp.eq.s32.totalorder %s14, 1
    %p88 = por %p86, %p87
    %p89 = scmp.ne.s32.totalorder %s80, %s81
    %p90 = scmp.eq.s32.totalorder %s14, 0
    %p91 = por %p89, %p90
    %p92 = scmp.ne.s32.totalorder %s80, %s81
    %p93 = scmp.eq.s32.totalorder %s15, 1
    %p94 = por %p92, %p93
    %p96 = scmp.ne.s32.totalorder %s81, %s95
    %p97 = scmp.eq.s32.totalorder %s15, 0
    %p98 = por %p96, %p97
    %s99 = ssub.s32 %s16, %s28
    %s100 = ssub.s32 %s17, %s24
    %s101 = sor.u32 %s99, %s100
    %p102 = scmp.eq.s32.totalorder %s101, 0
    %s104 = sadd.s32 %s103, 1
    %s105 = scalar_select %p102, %s103, %s104
    %p108 = pneg %p102
    %p109 = scmp.eq.s32.totalorder %s9, 1
    %p110 = por %p108, %p109
    %p111 = scmp.ne.s32.totalorder %s103, %s106
    %p112 = scmp.eq.s32.totalorder %s9, 0
    %p113 = por %p111, %p112
    %p114 = scmp.ne.s32.totalorder %s103, %s106
    %p115 = scmp.eq.s32.totalorder %s14, 1
    %p116 = por %p114, %p115
    %p117 = scmp.ne.s32.totalorder %s106, %s107
    %p118 = scmp.eq.s32.totalorder %s14, 0
    %p119 = por %p117, %p118
    %p120 = scmp.ne.s32.totalorder %s106, %s107
    %p121 = scmp.eq.s32.totalorder %s15, 1
    %p122 = por %p120, %p121
    %p124 = scmp.ne.s32.totalorder %s107, %s123
    %p125 = scmp.eq.s32.totalorder %s15, 0
    %p126 = por %p124, %p125
    %p127 = scmp.le.s32.totalorder 1, %s9
    %p128 = scmp.lt.s32.totalorder %s9, 3
    %p129 = pnand %p127, %p128
    %p130 = pneg %p129
    // Predicated region
    $region9: #{repvgg_block_down.1} parent=5 // pred_check
      _
    $region10: #{repvgg_block_down.1} parent=5 // pred_check_branch
      %132 = sbr.rel (%p129) target = $region12
    $region11: #{repvgg_block_down.1} parent=5 // pred_region
      %s133 = ssub.s32 %s9, 1
      // Predicated region
      $region13: #{repvgg_block_down.1} parent=11 // pred_check
        %p134 = pneg %p70
      $region14: #{repvgg_block_down.1} parent=11 // pred_check_branch
        %136 = sbr.rel (%p134) target = $region16
      $region15: #{repvgg_block_down.1} parent=11 // pred_region
        _
      $region16: #{repvgg_block_down.1} parent=11 // pred_fallthru
        _
      // Predicated region
      $region17: #{repvgg_block_down.1} parent=11 // pred_check
        %p137 = pneg %p91
      $region18: #{repvgg_block_down.1} parent=11 // pred_check_branch
        %139 = sbr.rel (%p137) target = $region20
      $region19: #{repvgg_block_down.1} parent=11 // pred_region
        _
      $region20: #{repvgg_block_down.1} parent=11 // pred_fallthru
        _
    $region12: #{repvgg_block_down.1} parent=5 // pred_fallthru
      _
    %p140 = scmp.lt.s32.totalorder %s9, 2
    // Predicated region
    $region21: #{repvgg_block_down.1} parent=5 // pred_check
      %p141 = pneg %p140
    $region22: #{repvgg_block_down.1} parent=5 // pred_check_branch
      %143 = sbr.rel (%p141) target = $region24
    $region23: #{repvgg_block_down.1} parent=5 // pred_region
      // Predicated region
      $region25: #{repvgg_block_down.1} parent=23 // pred_check
        %p144 = pneg %p43
      $region26: #{repvgg_block_down.1} parent=23 // pred_check_branch
        %146 = sbr.rel (%p144) target = $region28
      $region27: #{repvgg_block_down.1} parent=23 // pred_region
        %s147 = smul.u32 8, %s17
        %p148 = scmp.lt.s32.totalorder %s16, 1
        %s149 = scalar_select %p148, %s16, 1
        %p150 = scmp.lt.s32.totalorder %s147, 7
        %s151 = scalar_select %p150, %s147, 7
        %s152 = smul.addr %s149, 8
        %s153 = sadd.s32 %s151, %s152
        %s154 = smul.addr %s153, 4
        %s155 = scalar_lea.vmem %s0, %s154
        %s156 = smul.u32 8, %s17
      $region28: #{repvgg_block_down.1} parent=23 // pred_fallthru
        _
    $region24: #{repvgg_block_down.1} parent=5 // pred_fallthru
      _
    %p157 = scmp.le.s32.totalorder 1, %s9
    %p158 = scmp.lt.s32.totalorder %s9, 3
    %p159 = pnand %p157, %p158
    %p160 = pneg %p159
    // Predicated region
    $region29: #{repvgg_block_down.1} parent=5 // pred_check
      _
    $region30: #{repvgg_block_down.1} parent=5 // pred_check_branch
      %162 = sbr.rel (%p159) target = $region32
    $region31: #{repvgg_block_down.1} parent=5 // pred_region
      %s163 = ssub.s32 %s9, 1
      %s164 = smul.u32 8, %s19
      %p165 = scmp.lt.s32.totalorder %s18, 1
      %s166 = scalar_select %p165, %s18, 1
      %p167 = scmp.lt.s32.totalorder %s164, 7
      %s168 = scalar_select %p167, %s164, 7
      %s169 = smul.addr %s166, 8
      %s170 = sadd.s32 %s168, %s169
      %s171 = smul.addr %s170, 4
      %s172 = scalar_lea.vmem %s0, %s171
      %p173 = pneg %p49
      %p174 = pneg %p46
      %p175 = pneg %p70
      %p176 = pneg %p67
      %p177 = pneg %p91
      %p178 = pneg %p88
      %p179 = pneg %p119
      %p180 = pneg %p116
      %s181 = smul.u32 8, %s19
      %p182 = scmp.lt.s32.totalorder %s18, 1
      %s183 = scalar_select %p182, %s18, 1
      %p184 = scmp.lt.s32.totalorder %s181, 7
      %s185 = scalar_select %p184, %s181, 7
      %s186 = smul.addr %s183, 8
      %s187 = sadd.s32 %s185, %s186
      %s188 = smul.addr %s187, 8
      %s189 = scalar_lea.vmem %s3, %s188
      %s190 = smul.u32 8, %s19
      %p191 = scmp.lt.s32.totalorder %s18, 1
      %s192 = scalar_select %p191, %s18, 1
      %p193 = scmp.lt.s32.totalorder %s190, 7
      %s194 = scalar_select %p193, %s190, 7
      %s195 = smul.addr %s192, 8
      %s196 = sadd.s32 %s194, %s195
      %s197 = smul.addr %s196, 4
      %s198 = scalar_lea.vmem %s0, %s197
      %s199 = smul.u32 8, %s19
      %s200 = smul.u32 8, %s19
      %p201 = scmp.lt.s32.totalorder %s18, 1
      %s202 = scalar_select %p201, %s18, 1
      %p203 = scmp.lt.s32.totalorder %s200, 7
      %s204 = scalar_select %p203, %s200, 7
      %s205 = smul.addr %s202, 8
      %s206 = sadd.s32 %s204, %s205
      %s207 = smul.addr %s206, 8
      %s208 = scalar_lea.vmem %s3, %s207
      %s209 = smul.u32 8, %s19
      %v211 = vld [vmem:[%s198] sm:$0xf]
      %v212 = vld [vmem:[%s198 + $0x4] sm:$0xf]
      %v213 = vld [vmem:[%s198 + $0x8] sm:$0xf]
      %v214 = vld [vmem:[%s198 + $0xc] sm:$0xf]
      %v215 = vld [vmem:[%s198 + $0x10] sm:$0xf]
      %v216 = vld [vmem:[%s198 + $0x14] sm:$0xf]
      %v217 = vld [vmem:[%s198 + $0x18] sm:$0xf]
      %v218 = vld [vmem:[%s198 + $0x1c] sm:$0xf]
      %v219 = vld [vmem:[%s1] sm:$0xf]
      %v220 = vld [vmem:[%s1 + $0x4] sm:$0xf]
      %v221 = vld [vmem:[%s1 + $0x8] sm:$0xf]
      %v222 = vld [vmem:[%s1 + $0xc] sm:$0xf]
      %v223 = vld [vmem:[%s1 + $0x10] sm:$0xf]
      %v224 = vld [vmem:[%s1 + $0x14] sm:$0xf]
      %v225 = vld [vmem:[%s1 + $0x18] sm:$0xf]
      %v226 = vld [vmem:[%s1 + $0x1c] sm:$0xf]
      %v227 = vld [vmem:[%s1 + $0x20] sm:$0xf]
      %v228 = vld [vmem:[%s1 + $0x24] sm:$0xf]
      %v229 = vld [vmem:[%s1 + $0x28] sm:$0xf]
      %v230 = vld [vmem:[%s1 + $0x2c] sm:$0xf]
      %v231 = vld [vmem:[%s1 + $0x30] sm:$0xf]
      %v232 = vld [vmem:[%s1 + $0x34] sm:$0xf]
      %v233 = vld [vmem:[%s1 + $0x38] sm:$0xf]
      %v234 = vld [vmem:[%s1 + $0x3c] sm:$0xf]
      %v235 = vld [vmem:[%s2] sm:$0x1]
      %v237 = vlaneseq
      %v238 = vshrl.u32 %v237, 7
      %v239 = vsub.s32 0, %v238
      %v240 = vrot.slane %v235, %v239
      %v250 = vunpack.c.l.b16 %v211
      %v251 = vunpack.c.l.b16 %v212
      %v252 = vunpack.c.l.b16 %v213
      %v253 = vunpack.c.l.b16 %v214
      %v254 = vunpack.c.l.b16 %v215
      %v255 = vunpack.c.l.b16 %v216
      %v256 = vunpack.c.l.b16 %v217
      %v257 = vunpack.c.l.b16 %v218
      %v258 = vpack.c.b16 %v251, %v250
      %v259 = vpack.c.b16 %v253, %v252
      %v260 = vpack.c.b16 %v255, %v254
      %v261 = vpack.c.b16 %v257, %v256
      %v282 = vunpack.c.l.b16 %v219
      %v283 = vunpack.c.l.b16 %v220
      %v284 = vunpack.c.l.b16 %v221
      %v285 = vunpack.c.l.b16 %v222
      %v286 = vunpack.c.l.b16 %v223
      %v287 = vunpack.c.l.b16 %v224
      %v288 = vunpack.c.l.b16 %v225
      %v289 = vunpack.c.l.b16 %v226
      %v290 = vunpack.c.l.b16 %v227
      %v291 = vunpack.c.l.b16 %v228
      %v292 = vunpack.c.l.b16 %v229
      %v293 = vunpack.c.l.b16 %v230
      %v294 = vunpack.c.l.b16 %v231
      %v295 = vunpack.c.l.b16 %v232
      %v296 = vunpack.c.l.b16 %v233
      %v297 = vunpack.c.l.b16 %v234
      %v298 = vpack.c.b16 %v283, %v282
      %v299 = vpack.c.b16 %v285, %v284
      %v300 = vpack.c.b16 %v287, %v286
      %v301 = vpack.c.b16 %v289, %v288
      %v302 = vpack.c.b16 %v291, %v290
      %v303 = vpack.c.b16 %v293, %v292
      %v304 = vpack.c.b16 %v295, %v294
      %v305 = vpack.c.b16 %v297, %v296
      %314 = vmatprep.subr.bf16.mxu0 0
      %315 = vmatpush1.bf16.msra.mxu0 %v298
      %316 = vmatprep.subr.bf16.mxu0 0
      %317 = vmatpush1.bf16.msra.mxu0 %v299
      %318 = vmatprep.subr.bf16.mxu0 0
      %319 = vmatpush1.bf16.msra.mxu0 %v300
      %320 = vmatprep.subr.bf16.mxu0 0
      %321 = vmatpush1.bf16.msra.mxu0 %v301
      %322 = vmatprep.subr.bf16.mxu0 0
      %323 = vmatpush1.bf16.msra.mxu0 %v302
      %324 = vmatprep.subr.bf16.mxu0 0
      %325 = vmatpush1.bf16.msra.mxu0 %v303
      %326 = vmatprep.subr.bf16.mxu0 0
      %327 = vmatpush1.bf16.msra.mxu0 %v304
      %328 = vmatprep.subr.bf16.mxu0 0
      %329 = vmatpush1.bf16.msra.mxu0 %v305
      %330 = vmatprep.subr.bf16.mxu0 0
      %331 = vmatpush1.bf16.msra.mxu0 0
      %332 = vmatprep.subr.bf16.mxu0 0
      %333 = vmatpush1.bf16.msra.mxu0 0
      %334 = vmatprep.subr.bf16.mxu0 0
      %335 = vmatpush1.bf16.msra.mxu0 0
      %336 = vmatprep.subr.bf16.mxu0 0
      %337 = vmatpush1.bf16.msra.mxu0 0
      %338 = vmatprep.subr.bf16.mxu0 0
      %339 = vmatpush1.bf16.msra.mxu0 0
      %340 = vmatprep.subr.bf16.mxu0 0
      %341 = vmatpush1.bf16.msra.mxu0 0
      %342 = vmatprep.subr.bf16.mxu0 0
      %343 = vmatpush1.bf16.msra.mxu0 0
      %344 = vmatprep.subr.bf16.mxu0 0
      %345 = vmatpush1.bf16.msra.mxu0 0
      %346 = vmatprep.mubr.bf16.mxu0 0
      %347 = vmatmul.mubr.bf16.gmra.mrb[0].mxu0 %v258
      %v348 = vpop.f32.mrb[0].mxu0
      %v349 = vadd.f32 %v240, %v348
      %v350 = vpop.f32.mrb[0].mxu0
      %v351 = vpop.f32.mrb[0].mxu0
      %v352 = vadd.f32 %v240, %v351
      %v353 = vpop.f32.mrb[0].mxu0
      %354 = vmatprep.mubr.bf16.mxu0 0
      %355 = vmatmul.mubr.bf16.gmra.mrb[0].mxu0 %v259
      %v356 = vpop.f32.mrb[0].mxu0
      %v357 = vadd.f32 %v240, %v356
      %v358 = vpop.f32.mrb[0].mxu0
      %v359 = vpop.f32.mrb[0].mxu0
      %v360 = vadd.f32 %v240, %v359
      %v361 = vpop.f32.mrb[0].mxu0
      %362 = vmatprep.mubr.bf16.mxu0 0
      %363 = vmatmul.mubr.bf16.gmra.mrb[0].mxu0 %v260
      %v364 = vpop.f32.mrb[0].mxu0
      %v365 = vadd.f32 %v240, %v364
      %v366 = vpop.f32.mrb[0].mxu0
      %v367 = vpop.f32.mrb[0].mxu0
      %v368 = vadd.f32 %v240, %v367
      %v369 = vpop.f32.mrb[0].mxu0
      %370 = vmatprep.mubr.bf16.mxu0 0
      %371 = vmatmul.mubr.bf16.gmra.mrb[0].mxu0 %v261
      %v372 = vpop.f32.mrb[0].mxu0
      %v373 = vadd.f32 %v240, %v372
      %v374 = vpop.f32.mrb[0].mxu0
      %v375 = vpop.f32.mrb[0].mxu0
      %v376 = vadd.f32 %v240, %v375
      %v377 = vpop.f32.mrb[0].mxu0
      %378 = vdwg.mxu0
      %v379 = vmax.f32 %v349, 0.0
      %v380 = vmax.f32 %v352, 0.0
      %v381 = vmax.f32 %v357, 0.0
      %v382 = vmax.f32 %v360, 0.0
      %v383 = vmax.f32 %v365, 0.0
      %v384 = vmax.f32 %v368, 0.0
      %v385 = vmax.f32 %v373, 0.0
      %v386 = vmax.f32 %v376, 0.0
      %387 = vst [vmem:[%s208] sm:$0xff] %v379
      %388 = vst [vmem:[%s208 + $0x8] sm:$0xff] %v380
      %389 = vst [vmem:[%s208 + $0x10] sm:$0xff] %v381
      %390 = vst [vmem:[%s208 + $0x18] sm:$0xff] %v382
      %391 = vst [vmem:[%s208 + $0x20] sm:$0xff] %v383
      %392 = vst [vmem:[%s208 + $0x28] sm:$0xff] %v384
      %393 = vst [vmem:[%s208 + $0x30] sm:$0xff] %v385
      %394 = vst [vmem:[%s208 + $0x38] sm:$0xff] %v386
      %s395 = smul.u32 8, %s19
      %p396 = scmp.lt.s32.totalorder %s18, 1
      %s397 = scalar_select %p396, %s18, 1
      %p398 = scmp.lt.s32.totalorder %s395, 7
      %s399 = scalar_select %p398, %s395, 7
      %s400 = smul.addr %s397, 8
      %s401 = sadd.s32 %s399, %s400
      %s402 = smul.addr %s401, 8
      %s403 = scalar_lea.vmem %s3, %s402
      // Predicated region
      $region33: #{repvgg_block_down.1} parent=31 // pred_check
        %p404 = pneg %p116
      $region34: #{repvgg_block_down.1} parent=31 // pred_check_branch
        %406 = sbr.rel (%p404) target = $region36
      $region35: #{repvgg_block_down.1} parent=31 // pred_region
        %s407 = smul.u32 8, %s19
      $region36: #{repvgg_block_down.1} parent=31 // pred_fallthru
        _
    $region32: #{repvgg_block_down.1} parent=5 // pred_fallthru
      _
    %p408 = scmp.le.s32.totalorder 2, %s9
    // Predicated region
    $region37: #{repvgg_block_down.1} parent=5 // pred_check
      %p409 = pneg %p408
    $region38: #{repvgg_block_down.1} parent=5 // pred_check_branch
      %411 = sbr.rel (%p409) target = $region40
    $region39: #{repvgg_block_down.1} parent=5 // pred_region
      %s412 = ssub.s32 %s9, 2
      // Predicated region
      $region41: #{repvgg_block_down.1} parent=39 // pred_check
        %p413 = pneg %p122
      $region42: #{repvgg_block_down.1} parent=39 // pred_check_branch
        %415 = sbr.rel (%p413) target = $region44
      $region43: #{repvgg_block_down.1} parent=39 // pred_region
        %s416 = smul.u32 8, %s21
        %p417 = scmp.lt.s32.totalorder %s20, 1
        %s418 = scalar_select %p417, %s20, 1
        %p419 = scmp.lt.s32.totalorder %s416, 7
        %s420 = scalar_select %p419, %s416, 7
        %s421 = smul.addr %s418, 8
        %s422 = sadd.s32 %s420, %s421
        %s423 = smul.addr %s422, 8
        %s424 = scalar_lea.vmem %s3, %s423
      $region44: #{repvgg_block_down.1} parent=39 // pred_fallthru
        _
    $region40: #{repvgg_block_down.1} parent=5 // pred_fallthru
      _
  $region6: #{repvgg_block_down.1} parent=0 // loop_footer
    %s13 = sadd.s32 1, %s9
  $region7: #{repvgg_block_down.1} parent=0 // loop_footer_branch
    %8 = sbr.rel target = $region3
  $region8: #{repvgg_block_down.1} parent=0 // loop_exit
    _

</llo_original>
